<compile_context>
chip_gen: v7x
topology: tpu7x:2x2x1
jax: 0.10.0
libtpu: 0.0.40
codegen_flags: <defaults>
</compile_context>

<pallas_src>
import functools

import jax
import jax.numpy as jnp
from jax.experimental import pallas as pl
from jax.experimental.pallas import tpu as pltpu

_LANE = 128
_MAX_ROW_TILE = 8192          # hard cap on rows per tile
_MAX_FOLD_LANES = 512         # widest folded lane axis for the small-D path
_MIB = 1024 * 1024


def _cdiv(a, b):
    return -(-a // b)


def _sublane_pack(dtype):
    # rows per packed vreg sublane group: 8 for 4-byte, 16 for 2-byte, 32 for 1-byte.
    return max(8, 32 // jnp.dtype(dtype).itemsize)


@functools.lru_cache(maxsize=None)
def _vmem_limits():
    """Generation-aware (tile_budget_bytes, scoped_vmem_limit_bytes)."""
    cap = 128 * _MIB
    try:
        cap = int(pltpu.get_tpu_info().vmem_capacity_bytes)  # 64 MiB v7x, 128 MiB v5e/v6e
    except Exception:
        pass
    if cap <= 0:
        cap = 128 * _MIB
    limit = min((cap * 3) // 4, 96 * _MIB)   # 48 MiB on v7x, 96 MiB on v5e/v6e
    budget = max(min(cap // 2 - 4 * _MIB, limit - 8 * _MIB), 4 * _MIB)
    return budget, limit


def _compiler_params():
    _, limit = _vmem_limits()
    return pltpu.CompilerParams(
        dimension_semantics=("parallel",),
        vmem_limit_bytes=int(limit),
    )


def _choose_row_tile(n_rows, lane_width, dtype, row_tile=None):
    pack = _sublane_pack(dtype)
    if n_rows <= pack:
        return int(n_rows)  # single full-extent block (always a legal block shape)
    itemsize = jnp.dtype(dtype).itemsize
    if row_tile is None:
        budget, _ = _vmem_limits()
        # double-buffered input + output tiles (input dtype) plus live f32
        # temporaries (x_f32 / xc / y / broadcast mean/rstd) per element.
        f32_temps = 6 if itemsize < 4 else 4
        per_row = lane_width * (4 * itemsize + f32_temps * 4)
        row_tile = max(1, budget // per_row)
    tm = min(int(row_tile), _MAX_ROW_TILE, int(n_rows))
    # Guarantee >= 2 grid steps (prefer >= 4) so ("parallel",) semantics can
    # shard the grid across both v7x TensorCores.
    min_steps = 4 if n_rows >= 4 * pack else 2
    step_cap = max(pack, (_cdiv(n_rows, min_steps) // pack) * pack)
    tm = min(tm, step_cap)
    tm = max(pack, (tm // pack) * pack)
    return int(tm)


def _choose_fold(rows, ndim):
    """Largest fold factor k with rows % k == 0, (k*ndim) % 128 == 0, k*ndim <= 512."""
    if ndim <= 0 or ndim >= _LANE:
        return 0
    max_k = min(int(rows), _MAX_FOLD_LANES // ndim)
    for k in range(max_k, 1, -1):
        if rows % k == 0 and (k * ndim) % _LANE == 0:
            return k
    # Ragged row counts (no suitable divisor) fall back to the lane-sparse
    # (rows, D) path; a bulk-folded + remainder split would need an extra HBM
    # copy to reassemble, so it is not an obvious win and is left out.
    return 0


# ----------------------------- standard kernels ---------------------------- #
def _normalize_rows_vpu(x, w, b, eps):
    # Exact two-pass centered variance (strict parity with F.layer_norm), f32.
    mean = jnp.mean(x, axis=-1, keepdims=True)
    xc = x - mean
    var = jnp.mean(xc * xc, axis=-1, keepdims=True)
    y = xc * jax.lax.rsqrt(var + eps)
    y = y * w
    if b is not None:
        y = y + b
    return y


def _normalize_rows_mxu(x, w, b, eps, inv_d):
    # Two-pass centered variance with the row sums and the mean/rstd
    # lane-broadcasts routed through the (otherwise idle) MXU. 8 replicated
    # reduction columns keep the matmul shapes non-degenerate; the extra MXU
    # work (~32 MAC/elem) is far below the HBM roofline.
    d = x.shape[-1]
    ones_cols = jnp.full((d, 8), 1.0, dtype=jnp.float32)   # row sum, replicated x8
    spread = jnp.full((8, d), 0.125, dtype=jnp.float32)    # average the 8 copies back out
    sums = jnp.dot(x, ones_cols, preferred_element_type=jnp.float32)           # (tm, 8)
    mean = jnp.dot(sums * inv_d, spread, preferred_element_type=jnp.float32)   # (tm, d)
    xc = x - mean
    sq = jnp.dot(xc * xc, ones_cols, preferred_element_type=jnp.float32)       # (tm, 8)
    rstd = jax.lax.rsqrt(sq * inv_d + eps)                                     # (tm, 8) EUP
    y = xc * jnp.dot(rstd, spread, preferred_element_type=jnp.float32)         # (tm, d)
    y = y * w
    if b is not None:
        y = y + b
    return y


def _ln_std_kernel(*refs, eps, inv_d, has_bias, use_mxu):
    if has_bias:
        x_ref, w_ref, b_ref, o_ref = refs
    else:
        x_ref, w_ref, o_ref = refs
        b_ref = None
    x = x_ref[...].astype(jnp.float32)
    w = w_ref[...].astype(jnp.float32)
    b = b_ref[...].astype(jnp.float32) if b_ref is not None else None
    if use_mxu:
        y = _normalize_rows_mxu(x, w, b, eps, inv_d)
    else:
        y = _normalize_rows_vpu(x, w, b, eps)
    o_ref[...] = y.astype(o_ref.dtype)


# ---------------------- lane-folded kernel (small D) ----------------------- #
def _ln_fold_kernel(*refs, eps, inv_d, has_bias):
    # x: (tm, k*D); seg: (k*D, k) 0/1 indicator; per-segment LayerNorm of width
    # D. Segment sums / broadcasts go through the MXU (idle in this kernel).
    if has_bias:
        x_ref, seg_ref, segt_ref, w_ref, b_ref, o_ref = refs
    else:
        x_ref, seg_ref, segt_ref, w_ref, o_ref = refs
        b_ref = None
    x = x_ref[...].astype(jnp.float32)
    seg = seg_ref[...]
    seg_t = segt_ref[...]
    w = w_ref[...].astype(jnp.float32)
    sums = jnp.dot(x, seg, preferred_element_type=jnp.float32)                 # (tm, k)
    mean = jnp.dot(sums * inv_d, seg_t, preferred_element_type=jnp.float32)    # (tm, k*D)
    xc = x - mean
    sq = jnp.dot(xc * xc, seg, preferred_element_type=jnp.float32)             # (tm, k)
    rstd = jax.lax.rsqrt(sq * inv_d + eps)                                     # (tm, k) EUP
    y = xc * jnp.dot(rstd, seg_t, preferred_element_type=jnp.float32)
    y = y * w
    if b_ref is not None:
        y = y + b_ref[...].astype(jnp.float32)
    o_ref[...] = y.astype(o_ref.dtype)


# -------------------------------- wrapper ---------------------------------- #
def layer_norm(x, weight, bias=None, *, eps=1e-5, row_tile=None):
    """LayerNorm over the last axis of `x`, matching F.layer_norm semantics."""
    ndim = x.shape[-1]
    assert weight.shape == (ndim,)
    if bias is not None:
        assert bias.shape == (ndim,)

    orig_shape = x.shape
    rows = 1
    for d in orig_shape[:-1]:
        rows *= d
    if rows == 0 or ndim == 0:
        return x

    inv_d = 1.0 / float(ndim)

    # ---- Lane-folded path: small D folded into a dense lane axis. ----
    k = _choose_fold(rows, ndim)
    if k > 1:
        rows_f = rows // k
        lane_w = k * ndim
        x2 = x.reshape(rows_f, lane_w)   # free: row-major collapse, no copy pass
        w2 = jnp.tile(weight.reshape(1, ndim), (1, k))
        seg = (
            (jnp.arange(lane_w, dtype=jnp.int32)[:, None] // ndim)
            == jnp.arange(k, dtype=jnp.int32)[None, :]
        ).astype(jnp.float32)
        seg_t = seg.T  # precomputed to avoid an in-kernel transpose

        tm = _choose_row_tile(rows_f, lane_w, x.dtype, row_tile)
        grid = (pl.cdiv(rows_f, tm),)

        in_specs = [
            pl.BlockSpec((tm, lane_w), lambda i: (i, 0)),
            pl.BlockSpec((lane_w, k), lambda i: (0, 0)),
            pl.BlockSpec((k, lane_w), lambda i: (0, 0)),
            pl.BlockSpec((1, lane_w), lambda i: (0, 0)),
        ]
        operands = [x2, seg, seg_t, w2]
        if bias is not None:
            in_specs.append(pl.BlockSpec((1, lane_w), lambda i: (0, 0)))
            operands.append(jnp.tile(bias.reshape(1, ndim), (1, k)))
        kernel = functools.partial(
            _ln_fold_kernel, eps=eps, inv_d=inv_d, has_bias=bias is not None)

        out = pl.pallas_call(
            kernel,
            out_shape=jax.ShapeDtypeStruct((rows_f, lane_w), x.dtype),
            grid_spec=pltpu.PrefetchScalarGridSpec(
                num_scalar_prefetch=0,
                grid=grid,
                in_specs=in_specs,
                out_specs=pl.BlockSpec((tm, lane_w), lambda i: (i, 0)),
            ),
            compiler_params=_compiler_params(),
        )(*operands)
        return out.reshape(orig_shape)

    # ---- Standard path: (rows, D). cdiv grid; the overhanging last block's
    # rows are independent garbage whose writes Pallas masks, so the kernel
    # does exactly one HBM read + one HBM write of x (no pad/copy passes). ----
    x2 = x.reshape(rows, ndim)
    w2 = weight.reshape(1, ndim)
    tm = _choose_row_tile(rows, ndim, x.dtype, row_tile)
    grid = (pl.cdiv(rows, tm),)

    in_specs = [
        pl.BlockSpec((tm, ndim), lambda i: (i, 0)),
        pl.BlockSpec((1, ndim), lambda i: (0, 0)),
    ]
    operands = [x2, w2]
    if bias is not None:
        in_specs.append(pl.BlockSpec((1, ndim), lambda i: (0, 0)))
        operands.append(bias.reshape(1, ndim))
    # Sub-f32 inputs: HBM traffic is light enough (esp. v7x) that the VPU/XLU
    # reduce->broadcast chain binds before HBM; route it through the idle MXU.
    use_mxu = jnp.dtype(x.dtype).itemsize < 4
    kernel = functools.partial(
        _ln_std_kernel, eps=eps, inv_d=inv_d,
        has_bias=bias is not None, use_mxu=use_mxu)

    out = pl.pallas_call(
        kernel,
        out_shape=jax.ShapeDtypeStruct((rows, ndim), x.dtype),
        grid_spec=pltpu.PrefetchScalarGridSpec(
            num_scalar_prefetch=0,
            grid=grid,
            in_specs=in_specs,
            out_specs=pl.BlockSpec((tm, ndim), lambda i: (i, 0)),
        ),
        compiler_params=_compiler_params(),
    )(*operands)
    return out.reshape(orig_shape)


def _reference_layer_norm(x, weight, bias, eps=1e-5):
    xf = x.astype(jnp.float32)
    mean = jnp.mean(xf, axis=-1, keepdims=True)
    var = jnp.mean((xf - mean) ** 2, axis=-1, keepdims=True)
    y = (xf - mean) / jnp.sqrt(var + eps)
    y = y * weight
    if bias is not None:
        y = y + bias
    return y.astype(x.dtype)


if __name__ == "__main__":
    key = jax.random.PRNGKey(0)
    kx, kw, kb, kx2, kw2, kb2, kx3 = jax.random.split(key, 7)

    # --- Small-D (lane-folded) path: module's demo shape (batch=2, seq=8, hidden=32).
    batch, seq, hidden = 2, 8, 32
    x = jax.random.normal(kx, (batch, seq, hidden), dtype=jnp.float32)
    weight = jnp.ones((hidden,), jnp.float32) + 0.1 * jax.random.normal(kw, (hidden,))
    bias = 0.1 * jax.random.normal(kb, (hidden,))

    out = jax.block_until_ready(layer_norm(x, weight, bias))
    ref = _reference_layer_norm(x, weight, bias)
    assert jnp.allclose(out, ref, atol=1e-5, rtol=1e-5), "bias=True (folded) mismatch"

    out_nb = jax.block_until_ready(layer_norm(x, weight, None))
    ref_nb = _reference_layer_norm(x, weight, None)
    assert jnp.allclose(out_nb, ref_nb, atol=1e-5, rtol=1e-5), "bias=False (folded) mismatch"

    # --- Standard f32 path with a ragged row count (exercises the cdiv/overhang
    #     grid and the >=2-grid-step tiling).
    b2, s2, h2 = 3, 7, 256
    x_l = jax.random.normal(kx2, (b2, s2, h2), dtype=jnp.float32)
    w_l = jnp.ones((h2,), jnp.float32) + 0.1 * jax.random.normal(kw2, (h2,))
    b_l = 0.1 * jax.random.normal(kb2, (h2,))

    out_l = jax.block_until_ready(layer_norm(x_l, w_l, b_l))
    ref_l = _reference_layer_norm(x_l, w_l, b_l)
    assert jnp.allclose(out_l, ref_l, atol=1e-5, rtol=1e-5), "bias=True (standard) mismatch"

    out_lnb = jax.block_until_ready(layer_norm(x_l, w_l, None))
    ref_lnb = _reference_layer_norm(x_l, w_l, None)
    assert jnp.allclose(out_lnb, ref_lnb, atol=1e-5, rtol=1e-5), "bias=False (standard) mismatch"

    # --- bf16 standard path (exercises the MXU reduction/broadcast kernel).
    b3, s3, h3 = 4, 16, 256
    x_h = jax.random.normal(kx3, (b3, s3, h3), dtype=jnp.float32).astype(jnp.bfloat16)
    out_h = jax.block_until_ready(layer_norm(x_h, w_l, b_l))
    ref_h = _reference_layer_norm(x_h.astype(jnp.float32), w_l, b_l)
    assert jnp.allclose(out_h.astype(jnp.float32), ref_h, atol=5e-2, rtol=0.0), \
        "bf16 (MXU) mismatch"

    print("KERNEL_OK")
</pallas_src>

<mosaic_0001>
module attributes {stable_mosaic.version = 11 : i64} {
  func.func @_ln_fold_kernel(%arg0: i32, %arg1: memref<1x512xf32, #tpu.memory_space<vmem>>, %arg2: memref<512x16xf32, #tpu.memory_space<vmem>>, %arg3: memref<16x512xf32, #tpu.memory_space<vmem>>, %arg4: memref<1x512xf32, #tpu.memory_space<vmem>>, %arg5: memref<1x512xf32, #tpu.memory_space<vmem>>, %arg6: memref<1x512xf32, #tpu.memory_space<vmem>>) attributes {dimension_semantics = [#tpu.dimension_semantics<parallel>], iteration_bounds = array<i64: 1>, scalar_prefetch = 0 : i64, scratch_operands = 0 : i64, tpu.core_type = #tpu.core_type<tc>, window_params = [{transform_indices = @transform_0, window_bounds = array<i64: 1, 512>}, {pipeline_mode = #tpu.pipeline_mode<synchronous>, transform_indices = @transform_1, window_bounds = array<i64: 512, 16>}, {pipeline_mode = #tpu.pipeline_mode<synchronous>, transform_indices = @transform_2, window_bounds = array<i64: 16, 512>}, {pipeline_mode = #tpu.pipeline_mode<synchronous>, transform_indices = @transform_3, window_bounds = array<i64: 1, 512>}, {pipeline_mode = #tpu.pipeline_mode<synchronous>, transform_indices = @transform_4, window_bounds = array<i64: 1, 512>}, {transform_indices = @transform_5, window_bounds = array<i64: 1, 512>}]} {
    %c0 = arith.constant 0 : index
    %c0_0 = arith.constant 0 : index
    %0 = vector.load %arg1[%c0, %c0_0] : memref<1x512xf32, #tpu.memory_space<vmem>>, vector<1x512xf32>
    %c0_1 = arith.constant 0 : index
    %c0_2 = arith.constant 0 : index
    %1 = vector.load %arg2[%c0_1, %c0_2] : memref<512x16xf32, #tpu.memory_space<vmem>>, vector<512x16xf32>
    %c0_3 = arith.constant 0 : index
    %c0_4 = arith.constant 0 : index
    %2 = vector.load %arg3[%c0_3, %c0_4] : memref<16x512xf32, #tpu.memory_space<vmem>>, vector<16x512xf32>
    %c0_5 = arith.constant 0 : index
    %c0_6 = arith.constant 0 : index
    %3 = vector.load %arg4[%c0_5, %c0_6] : memref<1x512xf32, #tpu.memory_space<vmem>>, vector<1x512xf32>
    %cst = arith.constant dense<0.000000e+00> : vector<1x16xf32>
    %4 = tpu.matmul %0, %1, %cst {dimension_numbers = #tpu.dot_dimension_numbers<[1], [0], [0], [1], [0, 0, 1, 1], [], []>} : vector<1x512xf32>, vector<512x16xf32>, vector<1x16xf32> -> vector<1x16xf32>
    %cst_7 = arith.constant 3.125000e-02 : f32
    %5 = vector.broadcast %cst_7 : f32 to vector<1x16xf32>
    %6 = arith.mulf %4, %5 : vector<1x16xf32>
    %cst_8 = arith.constant dense<0.000000e+00> : vector<1x512xf32>
    %7 = tpu.matmul %6, %2, %cst_8 {dimension_numbers = #tpu.dot_dimension_numbers<[1], [0], [0], [1], [0, 0, 1, 1], [], []>} : vector<1x16xf32>, vector<16x512xf32>, vector<1x512xf32> -> vector<1x512xf32>
    %8 = arith.subf %0, %7 : vector<1x512xf32>
    %9 = arith.mulf %8, %8 : vector<1x512xf32>
    %cst_9 = arith.constant dense<0.000000e+00> : vector<1x16xf32>
    %10 = tpu.matmul %9, %1, %cst_9 {dimension_numbers = #tpu.dot_dimension_numbers<[1], [0], [0], [1], [0, 0, 1, 1], [], []>} : vector<1x512xf32>, vector<512x16xf32>, vector<1x16xf32> -> vector<1x16xf32>
    %cst_10 = arith.constant 3.125000e-02 : f32
    %11 = vector.broadcast %cst_10 : f32 to vector<1x16xf32>
    %12 = arith.mulf %10, %11 : vector<1x16xf32>
    %cst_11 = arith.constant 9.99999974E-6 : f32
    %13 = vector.broadcast %cst_11 : f32 to vector<1x16xf32>
    %14 = arith.addf %12, %13 : vector<1x16xf32>
    %15 = math.rsqrt %14 : vector<1x16xf32>
    %cst_12 = arith.constant dense<0.000000e+00> : vector<1x512xf32>
    %16 = tpu.matmul %15, %2, %cst_12 {dimension_numbers = #tpu.dot_dimension_numbers<[1], [0], [0], [1], [0, 0, 1, 1], [], []>} : vector<1x16xf32>, vector<16x512xf32>, vector<1x512xf32> -> vector<1x512xf32>
    %17 = arith.mulf %8, %16 : vector<1x512xf32>
    %18 = arith.mulf %17, %3 : vector<1x512xf32>
    %c0_13 = arith.constant 0 : index
    %c0_14 = arith.constant 0 : index
    %19 = vector.load %arg5[%c0_13, %c0_14] : memref<1x512xf32, #tpu.memory_space<vmem>>, vector<1x512xf32>
    %20 = arith.addf %18, %19 : vector<1x512xf32>
    %c0_15 = arith.constant 0 : index
    %c0_16 = arith.constant 0 : index
    %21 = vector.load %arg6[%c0_15, %c0_16] : memref<1x512xf32, #tpu.memory_space<vmem>>, vector<1x512xf32>
    tpu.vector_store %arg6[%c0_15, %c0_16], %20 {strides = array<i32>} : memref<1x512xf32, #tpu.memory_space<vmem>>, vector<1x512xf32>,
    return
  }
  func.func @transform_0(%arg0: i32) -> (i32, i32) {
    %c0_i32 = arith.constant 0 : i32
    %c0_i32_0 = arith.constant 0 : i32
    return %arg0, %c0_i32 : i32, i32
  }
  func.func @transform_1(%arg0: i32) -> (i32, i32) {
    %c0_i32 = arith.constant 0 : i32
    %c0_i32_0 = arith.constant 0 : i32
    %c0_i32_1 = arith.constant 0 : i32
    return %c0_i32, %c0_i32_0 : i32, i32
  }
  func.func @transform_2(%arg0: i32) -> (i32, i32) {
    %c0_i32 = arith.constant 0 : i32
    %c0_i32_0 = arith.constant 0 : i32
    %c0_i32_1 = arith.constant 0 : i32
    return %c0_i32, %c0_i32_0 : i32, i32
  }
  func.func @transform_3(%arg0: i32) -> (i32, i32) {
    %c0_i32 = arith.constant 0 : i32
    %c0_i32_0 = arith.constant 0 : i32
    %c0_i32_1 = arith.constant 0 : i32
    return %c0_i32, %c0_i32_0 : i32, i32
  }
  func.func @transform_4(%arg0: i32) -> (i32, i32) {
    %c0_i32 = arith.constant 0 : i32
    %c0_i32_0 = arith.constant 0 : i32
    %c0_i32_1 = arith.constant 0 : i32
    return %c0_i32, %c0_i32_0 : i32, i32
  }
  func.func @transform_5(%arg0: i32) -> (i32, i32) {
    %c0_i32 = arith.constant 0 : i32
    %c0_i32_0 = arith.constant 0 : i32
    return %arg0, %c0_i32 : i32, i32
  }
}

</mosaic_0001>

<llo_original>
// kernel: tpu_custom_call.1
$region0: #{tpu_custom_call.1}
  #allocation0 [shape = 'u32[]', space=smem, size = 0x4, offset = 0x4, fixed_abs, tag = 'smem constant byte address 0x4 - core index']
  #allocation1 [shape = 'u32[144,128]{1,0:T(1,128)}', space=vmem, size = 0x12000, scoped, tag = 'internal scratch']
  %s0 = inlined_call_operand.hbm [shape: f32[1,512], index: 0, kind: input, shape index: {}]
  %s1 = inlined_call_operand.hbm [shape: f32[512,16], index: 1, kind: input, shape index: {}]
  %s2 = inlined_call_operand.hbm [shape: f32[16,512], index: 2, kind: input, shape index: {}]
  %s3 = inlined_call_operand.hbm [shape: f32[1,512], index: 3, kind: input, shape index: {}]
  %s4 = inlined_call_operand.hbm [shape: f32[1,512], index: 4, kind: input, shape index: {}]
  %s5 = inlined_call_operand.hbm [shape: f32[1,512], index: 5, kind: output, shape index: {}]
  %s6 = sld [smem:[#allocation0]]
  $region50: #{tpu_custom_call.1} parent=0
    _
  %s8 = ssub.s32 1, %s6
  %s9 = scalar_select 0, %s8, %s6
  $region1: #{tpu_custom_call.1} parent=0
    #allocation2 [shape = 'u8[2048]{0}', space=vmem, size = 0x800, scoped, tag = 'input window, operand 0, single buffered']
    #allocation3 [shape = 's32[1]{0}', space=sflag, size = 0x4, scoped, tag = 'scoped memory for tpu_custom_call.1']
    #allocation4 [shape = 's32[1]{0}', space=sflag, size = 0x4, scoped, tag = 'scoped memory for tpu_custom_call.1']
    #allocation5 [shape = 'u8[262144]{0}', space=vmem, size = 0x40000, scoped, tag = 'input window, operand 1, single buffered']
    #allocation6 [shape = 's32[1]{0}', space=sflag, size = 0x4, scoped, tag = 'scoped memory for tpu_custom_call.1']
    #allocation7 [shape = 'u8[32768]{0}', space=vmem, size = 0x8000, scoped, tag = 'input window, operand 2, single buffered']
    #allocation8 [shape = 'u8[2048]{0}', space=vmem, size = 0x800, scoped, tag = 'input window, operand 3, single buffered']
    #allocation9 [shape = 's32[1]{0}', space=sflag, size = 0x4, scoped, tag = 'scoped memory for tpu_custom_call.1']
    #allocation10 [shape = 'u8[2048]{0}', space=vmem, size = 0x800, scoped, tag = 'input window, operand 4, single buffered']
    #allocation11 [shape = 'u8[2048]{0}', space=vmem, size = 0x800, scoped, tag = 'output window, operand 0, single buffered']
    %10 = vsyncpa [#allocation3], 0
    %11 = vsyncpa [#allocation6], 0
    %12 = vsyncpa [#allocation9], 0
    %13 = vsyncpa [#allocation4], 0
    // Predicated region
    $region2: #{tpu_custom_call.1} parent=1 // pred_check
      _
    $region3: #{tpu_custom_call.1} parent=1 // pred_check_branch
      %15 = sbr.rel (0) target = $region5
    $region4: #{tpu_custom_call.1} parent=1 // pred_region
      %s17 = ssub.s32 64, 64
      %18 = vsyncadd [#allocation3], %s17
      %s20 = sshll.u32 [#allocation2], 4
      %s21 = int_to_ptr.vmem [resolvable:$true] %s20
      %23 = dma.hbm_to_vmem [thread:$0]  %s0, 64, %s21, [#allocation3]
    $region5: #{tpu_custom_call.1} parent=1 // pred_fallthru
      _
    // Predicated region
    $region6: #{tpu_custom_call.1} parent=1 // pred_check
      _
    $region7: #{tpu_custom_call.1} parent=1 // pred_check_branch
      %25 = sbr.rel (0) target = $region9
    $region8: #{tpu_custom_call.1} parent=1 // pred_region
      %s27 = ssub.s32 8192, 8192
      %28 = vsyncadd [#allocation6], %s27
      %s29 = sshll.u32 [#allocation5], 4
      %s30 = int_to_ptr.vmem [resolvable:$true] %s29
      %35 = dma.hbm_to_vmem [thread:$0]  %s1, 8192, %s30, [#allocation6], 128, 128, 8
    $region9: #{tpu_custom_call.1} parent=1 // pred_fallthru
      _
    // Predicated region
    $region10: #{tpu_custom_call.1} parent=1 // pred_check
      _
    $region11: #{tpu_custom_call.1} parent=1 // pred_check_branch
      %37 = sbr.rel (0) target = $region13
    $region12: #{tpu_custom_call.1} parent=1 // pred_region
      %s39 = ssub.s32 1024, 1024
      %40 = vsyncadd [#allocation6], %s39
      %s41 = sshll.u32 [#allocation7], 4
      %s42 = int_to_ptr.vmem [resolvable:$true] %s41
      %47 = dma.hbm_to_vmem [thread:$0]  %s2, 1024, %s42, [#allocation6], 512, 512, 32
    $region13: #{tpu_custom_call.1} parent=1 // pred_fallthru
      _
    // Predicated region
    $region14: #{tpu_custom_call.1} parent=1 // pred_check
      _
    $region15: #{tpu_custom_call.1} parent=1 // pred_check_branch
      %49 = sbr.rel (0) target = $region17
    $region16: #{tpu_custom_call.1} parent=1 // pred_region
      %s51 = ssub.s32 64, 64
      %52 = vsyncadd [#allocation9], %s51
      %s54 = sshll.u32 [#allocation8], 4
      %s55 = int_to_ptr.vmem [resolvable:$true] %s54
      %57 = dma.hbm_to_vmem [thread:$0]  %s3, 64, %s55, [#allocation9]
    $region17: #{tpu_custom_call.1} parent=1 // pred_fallthru
      _
    // Predicated region
    $region18: #{tpu_custom_call.1} parent=1 // pred_check
      _
    $region19: #{tpu_custom_call.1} parent=1 // pred_check_branch
      %59 = sbr.rel (0) target = $region21
    $region20: #{tpu_custom_call.1} parent=1 // pred_region
      %s61 = ssub.s32 64, 64
      %62 = vsyncadd [#allocation9], %s61
      %s64 = sshll.u32 [#allocation10], 4
      %s65 = int_to_ptr.vmem [resolvable:$true] %s64
      %67 = dma.hbm_to_vmem [thread:$0]  %s4, 64, %s65, [#allocation9]
    $region21: #{tpu_custom_call.1} parent=1 // pred_fallthru
      _
    // Predicated region
    $region22: #{tpu_custom_call.1} parent=1 // pred_check
      _
    $region23: #{tpu_custom_call.1} parent=1 // pred_check_branch
      %69 = sbr.rel (0) target = $region25
    $region24: #{tpu_custom_call.1} parent=1 // pred_region
      %70 = dma.done [#allocation3], 64
    $region25: #{tpu_custom_call.1} parent=1 // pred_fallthru
      _
    // Predicated region
    $region26: #{tpu_custom_call.1} parent=1 // pred_check
      _
    $region27: #{tpu_custom_call.1} parent=1 // pred_check_branch
      %72 = sbr.rel (0) target = $region29
    $region28: #{tpu_custom_call.1} parent=1 // pred_region
      %73 = dma.done [#allocation6], 8192
    $region29: #{tpu_custom_call.1} parent=1 // pred_fallthru
      _
    // Predicated region
    $region30: #{tpu_custom_call.1} parent=1 // pred_check
      _
    $region31: #{tpu_custom_call.1} parent=1 // pred_check_branch
      %75 = sbr.rel (0) target = $region33
    $region32: #{tpu_custom_call.1} parent=1 // pred_region
      %76 = dma.done [#allocation6], 1024
    $region33: #{tpu_custom_call.1} parent=1 // pred_fallthru
      _
    // Predicated region
    $region34: #{tpu_custom_call.1} parent=1 // pred_check
      _
    $region35: #{tpu_custom_call.1} parent=1 // pred_check_branch
      %78 = sbr.rel (0) target = $region37
    $region36: #{tpu_custom_call.1} parent=1 // pred_region
      %79 = dma.done [#allocation9], 64
    $region37: #{tpu_custom_call.1} parent=1 // pred_fallthru
      _
    // Predicated region
    $region38: #{tpu_custom_call.1} parent=1 // pred_check
      _
    $region39: #{tpu_custom_call.1} parent=1 // pred_check_branch
      %81 = sbr.rel (0) target = $region41
    $region40: #{tpu_custom_call.1} parent=1 // pred_region
      %82 = dma.done [#allocation9], 64
    $region41: #{tpu_custom_call.1} parent=1 // pred_fallthru
      _
    %v83 = vld [vmem:[#allocation2] sm:$0xf]
    %v84 = vld [vmem:[#allocation5] sm:$0xff]
    %v85 = vld [vmem:[#allocation5 + $0x8] sm:$0xff]
    %v86 = vld [vmem:[#allocation5 + $0x10] sm:$0xff]
    %v87 = vld [vmem:[#allocation5 + $0x18] sm:$0xff]
    %v88 = vld [vmem:[#allocation5 + $0x20] sm:$0xff]
    %v89 = vld [vmem:[#allocation5 + $0x28] sm:$0xff]
    %v90 = vld [vmem:[#allocation5 + $0x30] sm:$0xff]
    %v91 = vld [vmem:[#allocation5 + $0x38] sm:$0xff]
    %v92 = vld [vmem:[#allocation5 + $0x40] sm:$0xff]
    %v93 = vld [vmem:[#allocation5 + $0x48] sm:$0xff]
    %v94 = vld [vmem:[#allocation5 + $0x50] sm:$0xff]
    %v95 = vld [vmem:[#allocation5 + $0x58] sm:$0xff]
    %v96 = vld [vmem:[#allocation5 + $0x60] sm:$0xff]
    %v97 = vld [vmem:[#allocation5 + $0x68] sm:$0xff]
    %v98 = vld [vmem:[#allocation5 + $0x70] sm:$0xff]
    %v99 = vld [vmem:[#allocation5 + $0x78] sm:$0xff]
    %v100 = vld [vmem:[#allocation5 + $0x80] sm:$0xff]
    %v101 = vld [vmem:[#allocation5 + $0x88] sm:$0xff]
    %v102 = vld [vmem:[#allocation5 + $0x90] sm:$0xff]
    %v103 = vld [vmem:[#allocation5 + $0x98] sm:$0xff]
    %v104 = vld [vmem:[#allocation5 + $0xa0] sm:$0xff]
    %v105 = vld [vmem:[#allocation5 + $0xa8] sm:$0xff]
    %v106 = vld [vmem:[#allocation5 + $0xb0] sm:$0xff]
    %v107 = vld [vmem:[#allocation5 + $0xb8] sm:$0xff]
    %v108 = vld [vmem:[#allocation5 + $0xc0] sm:$0xff]
    %v109 = vld [vmem:[#allocation5 + $0xc8] sm:$0xff]
    %v110 = vld [vmem:[#allocation5 + $0xd0] sm:$0xff]
    %v111 = vld [vmem:[#allocation5 + $0xd8] sm:$0xff]
    %v112 = vld [vmem:[#allocation5 + $0xe0] sm:$0xff]
    %v113 = vld [vmem:[#allocation5 + $0xe8] sm:$0xff]
    %v114 = vld [vmem:[#allocation5 + $0xf0] sm:$0xff]
    %v115 = vld [vmem:[#allocation5 + $0xf8] sm:$0xff]
    %v116 = vld [vmem:[#allocation5 + $0x100] sm:$0xff]
    %v117 = vld [vmem:[#allocation5 + $0x108] sm:$0xff]
    %v118 = vld [vmem:[#allocation5 + $0x110] sm:$0xff]
    %v119 = vld [vmem:[#allocation5 + $0x118] sm:$0xff]
    %v120 = vld [vmem:[#allocation5 + $0x120] sm:$0xff]
    %v121 = vld [vmem:[#allocation5 + $0x128] sm:$0xff]
    %v122 = vld [vmem:[#allocation5 + $0x130] sm:$0xff]
    %v123 = vld [vmem:[#allocation5 + $0x138] sm:$0xff]
    %v124 = vld [vmem:[#allocation5 + $0x140] sm:$0xff]
    %v125 = vld [vmem:[#allocation5 + $0x148] sm:$0xff]
    %v126 = vld [vmem:[#allocation5 + $0x150] sm:$0xff]
    %v127 = vld [vmem:[#allocation5 + $0x158] sm:$0xff]
    %v128 = vld [vmem:[#allocation5 + $0x160] sm:$0xff]
    %v129 = vld [vmem:[#allocation5 + $0x168] sm:$0xff]
    %v130 = vld [vmem:[#allocation5 + $0x170] sm:$0xff]
    %v131 = vld [vmem:[#allocation5 + $0x178] sm:$0xff]
    %v132 = vld [vmem:[#allocation5 + $0x180] sm:$0xff]
    %v133 = vld [vmem:[#allocation5 + $0x188] sm:$0xff]
    %v134 = vld [vmem:[#allocation5 + $0x190] sm:$0xff]
    %v135 = vld [vmem:[#allocation5 + $0x198] sm:$0xff]
    %v136 = vld [vmem:[#allocation5 + $0x1a0] sm:$0xff]
    %v137 = vld [vmem:[#allocation5 + $0x1a8] sm:$0xff]
    %v138 = vld [vmem:[#allocation5 + $0x1b0] sm:$0xff]
    %v139 = vld [vmem:[#allocation5 + $0x1b8] sm:$0xff]
    %v140 = vld [vmem:[#allocation5 + $0x1c0] sm:$0xff]
    %v141 = vld [vmem:[#allocation5 + $0x1c8] sm:$0xff]
    %v142 = vld [vmem:[#allocation5 + $0x1d0] sm:$0xff]
    %v143 = vld [vmem:[#allocation5 + $0x1d8] sm:$0xff]
    %v144 = vld [vmem:[#allocation5 + $0x1e0] sm:$0xff]
    %v145 = vld [vmem:[#allocation5 + $0x1e8] sm:$0xff]
    %v146 = vld [vmem:[#allocation5 + $0x1f0] sm:$0xff]
    %v147 = vld [vmem:[#allocation5 + $0x1f8] sm:$0xff]
    %v148 = vld [vmem:[#allocation7] sm:$0xff]
    %v149 = vld [vmem:[#allocation7 + $0x8] sm:$0xff]
    %v150 = vld [vmem:[#allocation7 + $0x10] sm:$0xff]
    %v151 = vld [vmem:[#allocation7 + $0x18] sm:$0xff]
    %v152 = vld [vmem:[#allocation7 + $0x20] sm:$0xff]
    %v153 = vld [vmem:[#allocation7 + $0x28] sm:$0xff]
    %v154 = vld [vmem:[#allocation7 + $0x30] sm:$0xff]
    %v155 = vld [vmem:[#allocation7 + $0x38] sm:$0xff]
    %v156 = vld [vmem:[#allocation8] sm:$0xf]
    %v158 = vlaneseq
    %v159 = vshrl.u32 %v158, 7
    %v160 = vsub.s32 0, %v159
    %v161 = vrot.slane %v83, %v160
    %v162 = vlaneseq
    %v163 = vshrl.u32 %v162, 7
    %v164 = vsub.s32 1, %v163
    %v165 = vrot.slane %v83, %v164
    %v166 = vlaneseq
    %v167 = vshrl.u32 %v166, 7
    %v168 = vsub.s32 2, %v167
    %v169 = vrot.slane %v83, %v168
    %v170 = vlaneseq
    %v171 = vshrl.u32 %v170, 7
    %v172 = vsub.s32 3, %v171
    %v173 = vrot.slane %v83, %v172
    %178 = vmatprep.subr.mxu0 0.0
    %179 = vmatpush1.msra.mxu0 %v84
    %180 = vmatprep.subr.mxu0 0.0
    %181 = vmatpush1.msra.mxu0 %v85
    %182 = vmatprep.subr.mxu0 0.0
    %183 = vmatpush1.msra.mxu0 %v86
    %184 = vmatprep.subr.mxu0 0.0
    %185 = vmatpush1.msra.mxu0 %v87
    %186 = vmatprep.subr.mxu0 0.0
    %187 = vmatpush1.msra.mxu0 %v88
    %188 = vmatprep.subr.mxu0 0.0
    %189 = vmatpush1.msra.mxu0 %v89
    %190 = vmatprep.subr.mxu0 0.0
    %191 = vmatpush1.msra.mxu0 %v90
    %192 = vmatprep.subr.mxu0 0.0
    %193 = vmatpush1.msra.mxu0 %v91
    %194 = vmatprep.subr.mxu0 0.0
    %195 = vmatpush1.msra.mxu0 %v92
    %196 = vmatprep.subr.mxu0 0.0
    %197 = vmatpush1.msra.mxu0 %v93
    %198 = vmatprep.subr.mxu0 0.0
    %199 = vmatpush1.msra.mxu0 %v94
    %200 = vmatprep.subr.mxu0 0.0
    %201 = vmatpush1.msra.mxu0 %v95
    %202 = vmatprep.subr.mxu0 0.0
    %203 = vmatpush1.msra.mxu0 %v96
    %204 = vmatprep.subr.mxu0 0.0
    %205 = vmatpush1.msra.mxu0 %v97
    %206 = vmatprep.subr.mxu0 0.0
    %207 = vmatpush1.msra.mxu0 %v98
    %208 = vmatprep.subr.mxu0 0.0
    %209 = vmatpush1.msra.mxu0 %v99
    %210 = vmatprep.subr.mxu0 0.0
    %211 = vmatpush1.msra.mxu0 %v100
    %212 = vmatprep.subr.mxu0 0.0
    %213 = vmatpush1.msra.mxu0 %v101
    %214 = vmatprep.subr.mxu0 0.0
    %215 = vmatpush1.msra.mxu0 %v102
    %216 = vmatprep.subr.mxu0 0.0
    %217 = vmatpush1.msra.mxu0 %v103
    %218 = vmatprep.subr.mxu0 0.0
    %219 = vmatpush1.msra.mxu0 %v104
    %220 = vmatprep.subr.mxu0 0.0
    %221 = vmatpush1.msra.mxu0 %v105
    %222 = vmatprep.subr.mxu0 0.0
    %223 = vmatpush1.msra.mxu0 %v106
    %224 = vmatprep.subr.mxu0 0.0
    %225 = vmatpush1.msra.mxu0 %v107
    %226 = vmatprep.subr.mxu0 0.0
    %227 = vmatpush1.msra.mxu0 %v108
    %228 = vmatprep.subr.mxu0 0.0
    %229 = vmatpush1.msra.mxu0 %v109
    %230 = vmatprep.subr.mxu0 0.0
    %231 = vmatpush1.msra.mxu0 %v110
    %232 = vmatprep.subr.mxu0 0.0
    %233 = vmatpush1.msra.mxu0 %v111
    %234 = vmatprep.subr.mxu0 0.0
    %235 = vmatpush1.msra.mxu0 %v112
    %236 = vmatprep.subr.mxu0 0.0
    %237 = vmatpush1.msra.mxu0 %v113
    %238 = vmatprep.subr.mxu0 0.0
    %239 = vmatpush1.msra.mxu0 %v114
    %240 = vmatprep.subr.mxu0 0.0
    %241 = vmatpush1.msra.mxu0 %v115
    %242 = vmatprep.mubr.f32.mxu0 %v165
    %243 = vmatmul.mubr.f32.gmra.mrb[0].mxu0 %v161
    %v244 = vpop.f32.mrb[0].mxu0
    %v245 = vadd.f32 0.0, %v244
    %v246 = vpop.f32.mrb[0].mxu0
    %247 = vdwg.mxu0
    %248 = vmatprep.subr.mxu0 0.0
    %249 = vmatpush1.msra.mxu0 %v116
    %250 = vmatprep.subr.mxu0 0.0
    %251 = vmatpush1.msra.mxu0 %v117
    %252 = vmatprep.subr.mxu0 0.0
    %253 = vmatpush1.msra.mxu0 %v118
    %254 = vmatprep.subr.mxu0 0.0
    %255 = vmatpush1.msra.mxu0 %v119
    %256 = vmatprep.subr.mxu0 0.0
    %257 = vmatpush1.msra.mxu0 %v120
    %258 = vmatprep.subr.mxu0 0.0
    %259 = vmatpush1.msra.mxu0 %v121
    %260 = vmatprep.subr.mxu0 0.0
    %261 = vmatpush1.msra.mxu0 %v122
    %262 = vmatprep.subr.mxu0 0.0
    %263 = vmatpush1.msra.mxu0 %v123
    %264 = vmatprep.subr.mxu0 0.0
    %265 = vmatpush1.msra.mxu0 %v124
    %266 = vmatprep.subr.mxu0 0.0
    %267 = vmatpush1.msra.mxu0 %v125
    %268 = vmatprep.subr.mxu0 0.0
    %269 = vmatpush1.msra.mxu0 %v126
    %270 = vmatprep.subr.mxu0 0.0
    %271 = vmatpush1.msra.mxu0 %v127
    %272 = vmatprep.subr.mxu0 0.0
    %273 = vmatpush1.msra.mxu0 %v128
    %274 = vmatprep.subr.mxu0 0.0
    %275 = vmatpush1.msra.mxu0 %v129
    %276 = vmatprep.subr.mxu0 0.0
    %277 = vmatpush1.msra.mxu0 %v130
    %278 = vmatprep.subr.mxu0 0.0
    %279 = vmatpush1.msra.mxu0 %v131
    %280 = vmatprep.subr.mxu0 0.0
    %281 = vmatpush1.msra.mxu0 %v132
    %282 = vmatprep.subr.mxu0 0.0
    %283 = vmatpush1.msra.mxu0 %v133
    %284 = vmatprep.subr.mxu0 0.0
    %285 = vmatpush1.msra.mxu0 %v134
    %286 = vmatprep.subr.mxu0 0.0
    %287 = vmatpush1.msra.mxu0 %v135
    %288 = vmatprep.subr.mxu0 0.0
    %289 = vmatpush1.msra.mxu0 %v136
    %290 = vmatprep.subr.mxu0 0.0
    %291 = vmatpush1.msra.mxu0 %v137
    %292 = vmatprep.subr.mxu0 0.0
    %293 = vmatpush1.msra.mxu0 %v138
    %294 = vmatprep.subr.mxu0 0.0
    %295 = vmatpush1.msra.mxu0 %v139
    %296 = vmatprep.subr.mxu0 0.0
    %297 = vmatpush1.msra.mxu0 %v140
    %298 = vmatprep.subr.mxu0 0.0
    %299 = vmatpush1.msra.mxu0 %v141
    %300 = vmatprep.subr.mxu0 0.0
    %301 = vmatpush1.msra.mxu0 %v142
    %302 = vmatprep.subr.mxu0 0.0
    %303 = vmatpush1.msra.mxu0 %v143
    %304 = vmatprep.subr.mxu0 0.0
    %305 = vmatpush1.msra.mxu0 %v144
    %306 = vmatprep.subr.mxu0 0.0
    %307 = vmatpush1.msra.mxu0 %v145
    %308 = vmatprep.subr.mxu0 0.0
    %309 = vmatpush1.msra.mxu0 %v146
    %310 = vmatprep.subr.mxu0 0.0
    %311 = vmatpush1.msra.mxu0 %v147
    %312 = vmatprep.mubr.f32.mxu0 %v173
    %313 = vmatmul.mubr.f32.gmra.mrb[0].mxu0 %v169
    %v314 = vpop.f32.mrb[0].mxu0
    %v315 = vadd.f32 %v245, %v314
    %v316 = vpop.f32.mrb[0].mxu0
    %317 = vdwg.mxu0
    %v318 = vmul.f32 %v315, 0.03125
    %vm319 = vcmask 130048
    %v321 = vsel %vm319, %v318, 0
    %323 = vmatprep.subr.mxu0 %v149
    %324 = vmatpush1.msra.mxu0 %v148
    %325 = vmatprep.subr.mxu0 %v153
    %326 = vmatpush1.msra.mxu0 %v152
    %327 = vmatprep.subr.mxu0 0.0
    %328 = vmatpush1.msra.mxu0 0.0
    %329 = vmatprep.subr.mxu0 0.0
    %330 = vmatpush1.msra.mxu0 0.0
    %331 = vmatprep.subr.mxu0 0.0
    %332 = vmatpush1.msra.mxu0 0.0
    %333 = vmatprep.subr.mxu0 0.0
    %334 = vmatpush1.msra.mxu0 0.0
    %335 = vmatprep.subr.mxu0 0.0
    %336 = vmatpush1.msra.mxu0 0.0
    %337 = vmatprep.subr.mxu0 0.0
    %338 = vmatpush1.msra.mxu0 0.0
    %339 = vmatprep.subr.mxu0 0.0
    %340 = vmatpush1.msra.mxu0 0.0
    %341 = vmatprep.subr.mxu0 0.0
    %342 = vmatpush1.msra.mxu0 0.0
    %343 = vmatprep.subr.mxu0 0.0
    %344 = vmatpush1.msra.mxu0 0.0
    %345 = vmatprep.subr.mxu0 0.0
    %346 = vmatpush1.msra.mxu0 0.0
    %347 = vmatprep.subr.mxu0 0.0
    %348 = vmatpush1.msra.mxu0 0.0
    %349 = vmatprep.subr.mxu0 0.0
    %350 = vmatpush1.msra.mxu0 0.0
    %351 = vmatprep.subr.mxu0 0.0
    %352 = vmatpush1.msra.mxu0 0.0
    %353 = vmatprep.subr.mxu0 0.0
    %354 = vmatpush1.msra.mxu0 0.0
    %355 = vmatprep.subr.mxu0 0.0
    %356 = vmatpush1.msra.mxu0 0.0
    %357 = vmatprep.subr.mxu0 0.0
    %358 = vmatpush1.msra.mxu0 0.0
    %359 = vmatprep.subr.mxu0 0.0
    %360 = vmatpush1.msra.mxu0 0.0
    %361 = vmatprep.subr.mxu0 0.0
    %362 = vmatpush1.msra.mxu0 0.0
    %363 = vmatprep.subr.mxu0 0.0
    %364 = vmatpush1.msra.mxu0 0.0
    %365 = vmatprep.subr.mxu0 0.0
    %366 = vmatpush1.msra.mxu0 0.0
    %367 = vmatprep.subr.mxu0 0.0
    %368 = vmatpush1.msra.mxu0 0.0
    %369 = vmatprep.subr.mxu0 0.0
    %370 = vmatpush1.msra.mxu0 0.0
    %371 = vmatprep.subr.mxu0 0.0
    %372 = vmatpush1.msra.mxu0 0.0
    %373 = vmatprep.subr.mxu0 0.0
    %374 = vmatpush1.msra.mxu0 0.0
    %375 = vmatprep.subr.mxu0 0.0
    %376 = vmatpush1.msra.mxu0 0.0
    %377 = vmatprep.subr.mxu0 0.0
    %378 = vmatpush1.msra.mxu0 0.0
    %379 = vmatprep.subr.mxu0 0.0
    %380 = vmatpush1.msra.mxu0 0.0
    %381 = vmatprep.subr.mxu0 0.0
    %382 = vmatpush1.msra.mxu0 0.0
    %383 = vmatprep.subr.mxu0 0.0
    %384 = vmatpush1.msra.mxu0 0.0
    %385 = vmatprep.subr.mxu0 0.0
    %386 = vmatpush1.msra.mxu0 0.0
    %387 = vmatprep.mubr.f32.mxu0 0.0
    %388 = vmatmul.mubr.f32.gmra.mrb[0].mxu0 %v321
    %v389 = vpop.f32.mrb[0].mxu0
    %v390 = vadd.f32 0.0, %v389
    %v391 = vpop.f32.mrb[0].mxu0
    %v392 = vadd.f32 0.0, %v391
    %393 = vdwg.mxu0
    %394 = vmatprep.subr.mxu0 %v151
    %395 = vmatpush1.msra.mxu0 %v150
    %396 = vmatprep.subr.mxu0 %v155
    %397 = vmatpush1.msra.mxu0 %v154
    %398 = vmatprep.subr.mxu0 0.0
    %399 = vmatpush1.msra.mxu0 0.0
    %400 = vmatprep.subr.mxu0 0.0
    %401 = vmatpush1.msra.mxu0 0.0
    %402 = vmatprep.subr.mxu0 0.0
    %403 = vmatpush1.msra.mxu0 0.0
    %404 = vmatprep.subr.mxu0 0.0
    %405 = vmatpush1.msra.mxu0 0.0
    %406 = vmatprep.subr.mxu0 0.0
    %407 = vmatpush1.msra.mxu0 0.0
    %408 = vmatprep.subr.mxu0 0.0
    %409 = vmatpush1.msra.mxu0 0.0
    %410 = vmatprep.subr.mxu0 0.0
    %411 = vmatpush1.msra.mxu0 0.0
    %412 = vmatprep.subr.mxu0 0.0
    %413 = vmatpush1.msra.mxu0 0.0
    %414 = vmatprep.subr.mxu0 0.0
    %415 = vmatpush1.msra.mxu0 0.0
    %416 = vmatprep.subr.mxu0 0.0
    %417 = vmatpush1.msra.mxu0 0.0
    %418 = vmatprep.subr.mxu0 0.0
    %419 = vmatpush1.msra.mxu0 0.0
    %420 = vmatprep.subr.mxu0 0.0
    %421 = vmatpush1.msra.mxu0 0.0
    %422 = vmatprep.subr.mxu0 0.0
    %423 = vmatpush1.msra.mxu0 0.0
    %424 = vmatprep.subr.mxu0 0.0
    %425 = vmatpush1.msra.mxu0 0.0
    %426 = vmatprep.subr.mxu0 0.0
    %427 = vmatpush1.msra.mxu0 0.0
    %428 = vmatprep.subr.mxu0 0.0
    %429 = vmatpush1.msra.mxu0 0.0
    %430 = vmatprep.subr.mxu0 0.0
    %431 = vmatpush1.msra.mxu0 0.0
    %432 = vmatprep.subr.mxu0 0.0
    %433 = vmatpush1.msra.mxu0 0.0
    %434 = vmatprep.subr.mxu0 0.0
    %435 = vmatpush1.msra.mxu0 0.0
    %436 = vmatprep.subr.mxu0 0.0
    %437 = vmatpush1.msra.mxu0 0.0
    %438 = vmatprep.subr.mxu0 0.0
    %439 = vmatpush1.msra.mxu0 0.0
    %440 = vmatprep.subr.mxu0 0.0
    %441 = vmatpush1.msra.mxu0 0.0
    %442 = vmatprep.subr.mxu0 0.0
    %443 = vmatpush1.msra.mxu0 0.0
    %444 = vmatprep.subr.mxu0 0.0
    %445 = vmatpush1.msra.mxu0 0.0
    %446 = vmatprep.subr.mxu0 0.0
    %447 = vmatpush1.msra.mxu0 0.0
    %448 = vmatprep.subr.mxu0 0.0
    %449 = vmatpush1.msra.mxu0 0.0
    %450 = vmatprep.subr.mxu0 0.0
    %451 = vmatpush1.msra.mxu0 0.0
    %452 = vmatprep.subr.mxu0 0.0
    %453 = vmatpush1.msra.mxu0 0.0
    %454 = vmatprep.subr.mxu0 0.0
    %455 = vmatpush1.msra.mxu0 0.0
    %456 = vmatprep.subr.mxu0 0.0
    %457 = vmatpush1.msra.mxu0 0.0
    %458 = vmatprep.mubr.f32.mxu0 0.0
    %459 = vmatmul.mubr.f32.gmra.mrb[0].mxu0 %v321
    %v460 = vpop.f32.mrb[0].mxu0
    %v461 = vadd.f32 0.0, %v460
    %v462 = vpop.f32.mrb[0].mxu0
    %v463 = vadd.f32 0.0, %v462
    %464 = vdwg.mxu0
    %v469 = vcombine.low %v390, %v392
    %v470 = vcombine.low %v461, %v463
    %v472 = vunpack.c.l.s4 1966171168
    %v473 = vunpack.c.0.s8 %v472
    %v474 = vlaneseq
    %v475 = vshrl.u32 %v474, 7
    %v476 = vsub.s32 %v473, %v475
    %v477 = vrot.slane %v469, %v476
    %v479 = vunpack.c.l.s4 1966171168
    %v480 = vunpack.c.0.s8 %v479
    %v481 = vlaneseq
    %v482 = vshrl.u32 %v481, 7
    %v483 = vsub.s32 %v480, %v482
    %v484 = vrot.slane %v470, %v483
    %v485 = vcombine.low %v477, %v484
    %v487 = vunpack.c.l.s4 1966171168
    %v488 = vunpack.c.0.s8 %v487
    %v489 = vlaneseq
    %v490 = vshrl.u32 %v489, 7
    %v491 = vsub.s32 %v488, %v490
    %v492 = vrot.slane %v485, %v491
    %v494 = vsub.f32 %v83, %v492
    %v495 = vmul.f32 %v494, %v494
    %v497 = vlaneseq
    %v498 = vshrl.u32 %v497, 7
    %v499 = vsub.s32 0, %v498
    %v500 = vrot.slane %v495, %v499
    %v501 = vlaneseq
    %v502 = vshrl.u32 %v501, 7
    %v503 = vsub.s32 1, %v502
    %v504 = vrot.slane %v495, %v503
    %v505 = vlaneseq
    %v506 = vshrl.u32 %v505, 7
    %v507 = vsub.s32 2, %v506
    %v508 = vrot.slane %v495, %v507
    %v509 = vlaneseq
    %v510 = vshrl.u32 %v509, 7
    %v511 = vsub.s32 3, %v510
    %v512 = vrot.slane %v495, %v511
    %517 = vmatprep.subr.mxu0 0.0
    %518 = vmatpush1.msra.mxu0 %v84
    %519 = vmatprep.subr.mxu0 0.0
    %520 = vmatpush1.msra.mxu0 %v85
    %521 = vmatprep.subr.mxu0 0.0
    %522 = vmatpush1.msra.mxu0 %v86
    %523 = vmatprep.subr.mxu0 0.0
    %524 = vmatpush1.msra.mxu0 %v87
    %525 = vmatprep.subr.mxu0 0.0
    %526 = vmatpush1.msra.mxu0 %v88
    %527 = vmatprep.subr.mxu0 0.0
    %528 = vmatpush1.msra.mxu0 %v89
    %529 = vmatprep.subr.mxu0 0.0
    %530 = vmatpush1.msra.mxu0 %v90
    %531 = vmatprep.subr.mxu0 0.0
    %532 = vmatpush1.msra.mxu0 %v91
    %533 = vmatprep.subr.mxu0 0.0
    %534 = vmatpush1.msra.mxu0 %v92
    %535 = vmatprep.subr.mxu0 0.0
    %536 = vmatpush1.msra.mxu0 %v93
    %537 = vmatprep.subr.mxu0 0.0
    %538 = vmatpush1.msra.mxu0 %v94
    %539 = vmatprep.subr.mxu0 0.0
    %540 = vmatpush1.msra.mxu0 %v95
    %541 = vmatprep.subr.mxu0 0.0
    %542 = vmatpush1.msra.mxu0 %v96
    %543 = vmatprep.subr.mxu0 0.0
    %544 = vmatpush1.msra.mxu0 %v97
    %545 = vmatprep.subr.mxu0 0.0
    %546 = vmatpush1.msra.mxu0 %v98
    %547 = vmatprep.subr.mxu0 0.0
    %548 = vmatpush1.msra.mxu0 %v99
    %549 = vmatprep.subr.mxu0 0.0
    %550 = vmatpush1.msra.mxu0 %v100
    %551 = vmatprep.subr.mxu0 0.0
    %552 = vmatpush1.msra.mxu0 %v101
    %553 = vmatprep.subr.mxu0 0.0
    %554 = vmatpush1.msra.mxu0 %v102
    %555 = vmatprep.subr.mxu0 0.0
    %556 = vmatpush1.msra.mxu0 %v103
    %557 = vmatprep.subr.mxu0 0.0
    %558 = vmatpush1.msra.mxu0 %v104
    %559 = vmatprep.subr.mxu0 0.0
    %560 = vmatpush1.msra.mxu0 %v105
    %561 = vmatprep.subr.mxu0 0.0
    %562 = vmatpush1.msra.mxu0 %v106
    %563 = vmatprep.subr.mxu0 0.0
    %564 = vmatpush1.msra.mxu0 %v107
    %565 = vmatprep.subr.mxu0 0.0
    %566 = vmatpush1.msra.mxu0 %v108
    %567 = vmatprep.subr.mxu0 0.0
    %568 = vmatpush1.msra.mxu0 %v109
    %569 = vmatprep.subr.mxu0 0.0
    %570 = vmatpush1.msra.mxu0 %v110
    %571 = vmatprep.subr.mxu0 0.0
    %572 = vmatpush1.msra.mxu0 %v111
    %573 = vmatprep.subr.mxu0 0.0
    %574 = vmatpush1.msra.mxu0 %v112
    %575 = vmatprep.subr.mxu0 0.0
    %576 = vmatpush1.msra.mxu0 %v113
    %577 = vmatprep.subr.mxu0 0.0
    %578 = vmatpush1.msra.mxu0 %v114
    %579 = vmatprep.subr.mxu0 0.0
    %580 = vmatpush1.msra.mxu0 %v115
    %581 = vmatprep.mubr.f32.mxu0 %v504
    %582 = vmatmul.mubr.f32.gmra.mrb[0].mxu0 %v500
    %v583 = vpop.f32.mrb[0].mxu0
    %v584 = vadd.f32 0.0, %v583
    %v585 = vpop.f32.mrb[0].mxu0
    %586 = vdwg.mxu0
    %587 = vmatprep.subr.mxu0 0.0
    %588 = vmatpush1.msra.mxu0 %v116
    %589 = vmatprep.subr.mxu0 0.0
    %590 = vmatpush1.msra.mxu0 %v117
    %591 = vmatprep.subr.mxu0 0.0
    %592 = vmatpush1.msra.mxu0 %v118
    %593 = vmatprep.subr.mxu0 0.0
    %594 = vmatpush1.msra.mxu0 %v119
    %595 = vmatprep.subr.mxu0 0.0
    %596 = vmatpush1.msra.mxu0 %v120
    %597 = vmatprep.subr.mxu0 0.0
    %598 = vmatpush1.msra.mxu0 %v121
    %599 = vmatprep.subr.mxu0 0.0
    %600 = vmatpush1.msra.mxu0 %v122
    %601 = vmatprep.subr.mxu0 0.0
    %602 = vmatpush1.msra.mxu0 %v123
    %603 = vmatprep.subr.mxu0 0.0
    %604 = vmatpush1.msra.mxu0 %v124
    %605 = vmatprep.subr.mxu0 0.0
    %606 = vmatpush1.msra.mxu0 %v125
    %607 = vmatprep.subr.mxu0 0.0
    %608 = vmatpush1.msra.mxu0 %v126
    %609 = vmatprep.subr.mxu0 0.0
    %610 = vmatpush1.msra.mxu0 %v127
    %611 = vmatprep.subr.mxu0 0.0
    %612 = vmatpush1.msra.mxu0 %v128
    %613 = vmatprep.subr.mxu0 0.0
    %614 = vmatpush1.msra.mxu0 %v129
    %615 = vmatprep.subr.mxu0 0.0
    %616 = vmatpush1.msra.mxu0 %v130
    %617 = vmatprep.subr.mxu0 0.0
    %618 = vmatpush1.msra.mxu0 %v131
    %619 = vmatprep.subr.mxu0 0.0
    %620 = vmatpush1.msra.mxu0 %v132
    %621 = vmatprep.subr.mxu0 0.0
    %622 = vmatpush1.msra.mxu0 %v133
    %623 = vmatprep.subr.mxu0 0.0
    %624 = vmatpush1.msra.mxu0 %v134
    %625 = vmatprep.subr.mxu0 0.0
    %626 = vmatpush1.msra.mxu0 %v135
    %627 = vmatprep.subr.mxu0 0.0
    %628 = vmatpush1.msra.mxu0 %v136
    %629 = vmatprep.subr.mxu0 0.0
    %630 = vmatpush1.msra.mxu0 %v137
    %631 = vmatprep.subr.mxu0 0.0
    %632 = vmatpush1.msra.mxu0 %v138
    %633 = vmatprep.subr.mxu0 0.0
    %634 = vmatpush1.msra.mxu0 %v139
    %635 = vmatprep.subr.mxu0 0.0
    %636 = vmatpush1.msra.mxu0 %v140
    %637 = vmatprep.subr.mxu0 0.0
    %638 = vmatpush1.msra.mxu0 %v141
    %639 = vmatprep.subr.mxu0 0.0
    %640 = vmatpush1.msra.mxu0 %v142
    %641 = vmatprep.subr.mxu0 0.0
    %642 = vmatpush1.msra.mxu0 %v143
    %643 = vmatprep.subr.mxu0 0.0
    %644 = vmatpush1.msra.mxu0 %v144
    %645 = vmatprep.subr.mxu0 0.0
    %646 = vmatpush1.msra.mxu0 %v145
    %647 = vmatprep.subr.mxu0 0.0
    %648 = vmatpush1.msra.mxu0 %v146
    %649 = vmatprep.subr.mxu0 0.0
    %650 = vmatpush1.msra.mxu0 %v147
    %651 = vmatprep.mubr.f32.mxu0 %v512
    %652 = vmatmul.mubr.f32.gmra.mrb[0].mxu0 %v508
    %v653 = vpop.f32.mrb[0].mxu0
    %v654 = vadd.f32 %v584, %v653
    %v655 = vpop.f32.mrb[0].mxu0
    %656 = vdwg.mxu0
    %v657 = vmul.f32 %v654, 0.03125
    %v658 = vadd.f32 %v657, 1e-05
    %v659 = vrsqrt.pop %v658
    %v661 = vsel %vm319, %v659, 0
    %663 = vmatprep.subr.mxu0 %v149
    %664 = vmatpush1.msra.mxu0 %v148
    %665 = vmatprep.subr.mxu0 %v153
    %666 = vmatpush1.msra.mxu0 %v152
    %667 = vmatprep.subr.mxu0 0.0
    %668 = vmatpush1.msra.mxu0 0.0
    %669 = vmatprep.subr.mxu0 0.0
    %670 = vmatpush1.msra.mxu0 0.0
    %671 = vmatprep.subr.mxu0 0.0
    %672 = vmatpush1.msra.mxu0 0.0
    %673 = vmatprep.subr.mxu0 0.0
    %674 = vmatpush1.msra.mxu0 0.0
    %675 = vmatprep.subr.mxu0 0.0
    %676 = vmatpush1.msra.mxu0 0.0
    %677 = vmatprep.subr.mxu0 0.0
    %678 = vmatpush1.msra.mxu0 0.0
    %679 = vmatprep.subr.mxu0 0.0
    %680 = vmatpush1.msra.mxu0 0.0
    %681 = vmatprep.subr.mxu0 0.0
    %682 = vmatpush1.msra.mxu0 0.0
    %683 = vmatprep.subr.mxu0 0.0
    %684 = vmatpush1.msra.mxu0 0.0
    %685 = vmatprep.subr.mxu0 0.0
    %686 = vmatpush1.msra.mxu0 0.0
    %687 = vmatprep.subr.mxu0 0.0
    %688 = vmatpush1.msra.mxu0 0.0
    %689 = vmatprep.subr.mxu0 0.0
    %690 = vmatpush1.msra.mxu0 0.0
    %691 = vmatprep.subr.mxu0 0.0
    %692 = vmatpush1.msra.mxu0 0.0
    %693 = vmatprep.subr.mxu0 0.0
    %694 = vmatpush1.msra.mxu0 0.0
    %695 = vmatprep.subr.mxu0 0.0
    %696 = vmatpush1.msra.mxu0 0.0
    %697 = vmatprep.subr.mxu0 0.0
    %698 = vmatpush1.msra.mxu0 0.0
    %699 = vmatprep.subr.mxu0 0.0
    %700 = vmatpush1.msra.mxu0 0.0
    %701 = vmatprep.subr.mxu0 0.0
    %702 = vmatpush1.msra.mxu0 0.0
    %703 = vmatprep.subr.mxu0 0.0
    %704 = vmatpush1.msra.mxu0 0.0
    %705 = vmatprep.subr.mxu0 0.0
    %706 = vmatpush1.msra.mxu0 0.0
    %707 = vmatprep.subr.mxu0 0.0
    %708 = vmatpush1.msra.mxu0 0.0
    %709 = vmatprep.subr.mxu0 0.0
    %710 = vmatpush1.msra.mxu0 0.0
    %711 = vmatprep.subr.mxu0 0.0
    %712 = vmatpush1.msra.mxu0 0.0
    %713 = vmatprep.subr.mxu0 0.0
    %714 = vmatpush1.msra.mxu0 0.0
    %715 = vmatprep.subr.mxu0 0.0
    %716 = vmatpush1.msra.mxu0 0.0
    %717 = vmatprep.subr.mxu0 0.0
    %718 = vmatpush1.msra.mxu0 0.0
    %719 = vmatprep.subr.mxu0 0.0
    %720 = vmatpush1.msra.mxu0 0.0
    %721 = vmatprep.subr.mxu0 0.0
    %722 = vmatpush1.msra.mxu0 0.0
    %723 = vmatprep.subr.mxu0 0.0
    %724 = vmatpush1.msra.mxu0 0.0
    %725 = vmatprep.subr.mxu0 0.0
    %726 = vmatpush1.msra.mxu0 0.0
    %727 = vmatprep.mubr.f32.mxu0 0.0
    %728 = vmatmul.mubr.f32.gmra.mrb[0].mxu0 %v661
    %v729 = vpop.f32.mrb[0].mxu0
    %v730 = vadd.f32 0.0, %v729
    %v731 = vpop.f32.mrb[0].mxu0
    %v732 = vadd.f32 0.0, %v731
    %733 = vdwg.mxu0
    %734 = vmatprep.subr.mxu0 %v151
    %735 = vmatpush1.msra.mxu0 %v150
    %736 = vmatprep.subr.mxu0 %v155
    %737 = vmatpush1.msra.mxu0 %v154
    %738 = vmatprep.subr.mxu0 0.0
    %739 = vmatpush1.msra.mxu0 0.0
    %740 = vmatprep.subr.mxu0 0.0
    %741 = vmatpush1.msra.mxu0 0.0
    %742 = vmatprep.subr.mxu0 0.0
    %743 = vmatpush1.msra.mxu0 0.0
    %744 = vmatprep.subr.mxu0 0.0
    %745 = vmatpush1.msra.mxu0 0.0
    %746 = vmatprep.subr.mxu0 0.0
    %747 = vmatpush1.msra.mxu0 0.0
    %748 = vmatprep.subr.mxu0 0.0
    %749 = vmatpush1.msra.mxu0 0.0
    %750 = vmatprep.subr.mxu0 0.0
    %751 = vmatpush1.msra.mxu0 0.0
    %752 = vmatprep.subr.mxu0 0.0
    %753 = vmatpush1.msra.mxu0 0.0
    %754 = vmatprep.subr.mxu0 0.0
    %755 = vmatpush1.msra.mxu0 0.0
    %756 = vmatprep.subr.mxu0 0.0
    %757 = vmatpush1.msra.mxu0 0.0
    %758 = vmatprep.subr.mxu0 0.0
    %759 = vmatpush1.msra.mxu0 0.0
    %760 = vmatprep.subr.mxu0 0.0
    %761 = vmatpush1.msra.mxu0 0.0
    %762 = vmatprep.subr.mxu0 0.0
    %763 = vmatpush1.msra.mxu0 0.0
    %764 = vmatprep.subr.mxu0 0.0
    %765 = vmatpush1.msra.mxu0 0.0
    %766 = vmatprep.subr.mxu0 0.0
    %767 = vmatpush1.msra.mxu0 0.0
    %768 = vmatprep.subr.mxu0 0.0
    %769 = vmatpush1.msra.mxu0 0.0
    %770 = vmatprep.subr.mxu0 0.0
    %771 = vmatpush1.msra.mxu0 0.0
    %772 = vmatprep.subr.mxu0 0.0
    %773 = vmatpush1.msra.mxu0 0.0
    %774 = vmatprep.subr.mxu0 0.0
    %775 = vmatpush1.msra.mxu0 0.0
    %776 = vmatprep.subr.mxu0 0.0
    %777 = vmatpush1.msra.mxu0 0.0
    %778 = vmatprep.subr.mxu0 0.0
    %779 = vmatpush1.msra.mxu0 0.0
    %780 = vmatprep.subr.mxu0 0.0
    %781 = vmatpush1.msra.mxu0 0.0
    %782 = vmatprep.subr.mxu0 0.0
    %783 = vmatpush1.msra.mxu0 0.0
    %784 = vmatprep.subr.mxu0 0.0
    %785 = vmatpush1.msra.mxu0 0.0
    %786 = vmatprep.subr.mxu0 0.0
    %787 = vmatpush1.msra.mxu0 0.0
    %788 = vmatprep.subr.mxu0 0.0
    %789 = vmatpush1.msra.mxu0 0.0
    %790 = vmatprep.subr.mxu0 0.0
    %791 = vmatpush1.msra.mxu0 0.0
    %792 = vmatprep.subr.mxu0 0.0
    %793 = vmatpush1.msra.mxu0 0.0
    %794 = vmatprep.subr.mxu0 0.0
    %795 = vmatpush1.msra.mxu0 0.0
    %796 = vmatprep.subr.mxu0 0.0
    %797 = vmatpush1.msra.mxu0 0.0
    %798 = vmatprep.mubr.f32.mxu0 0.0
    %799 = vmatmul.mubr.f32.gmra.mrb[0].mxu0 %v661
    %v800 = vpop.f32.mrb[0].mxu0
    %v801 = vadd.f32 0.0, %v800
    %v802 = vpop.f32.mrb[0].mxu0
    %v803 = vadd.f32 0.0, %v802
    %804 = vdwg.mxu0
    %v809 = vcombine.low %v730, %v732
    %v810 = vcombine.low %v801, %v803
    %v812 = vunpack.c.l.s4 1966171168
    %v813 = vunpack.c.0.s8 %v812
    %v814 = vlaneseq
    %v815 = vshrl.u32 %v814, 7
    %v816 = vsub.s32 %v813, %v815
    %v817 = vrot.slane %v809, %v816
    %v819 = vunpack.c.l.s4 1966171168
    %v820 = vunpack.c.0.s8 %v819
    %v821 = vlaneseq
    %v822 = vshrl.u32 %v821, 7
    %v823 = vsub.s32 %v820, %v822
    %v824 = vrot.slane %v810, %v823
    %v825 = vcombine.low %v817, %v824
    %v827 = vunpack.c.l.s4 1966171168
    %v828 = vunpack.c.0.s8 %v827
    %v829 = vlaneseq
    %v830 = vshrl.u32 %v829, 7
    %v831 = vsub.s32 %v828, %v830
    %v832 = vrot.slane %v825, %v831
    %v834 = vmul.f32 %v494, %v832
    %v835 = vmul.f32 %v834, %v156
    %v836 = vld [vmem:[#allocation10] sm:$0xf]
    %v837 = vadd.f32 %v835, %v836
    %v838 = vlaneseq
    %vm839 = vcmp.ge.s32.totalorder %v838, 0
    %vm840 = vcmp.lt.s32.totalorder %v838, 512
    %vm841 = vmand %vm839, %vm840
    %842 = vst.msk [vmem:[#allocation11] sm:$0xf] %vm841, %v837
    // Predicated region
    $region42: #{tpu_custom_call.1} parent=1 // pred_check
      _
    $region43: #{tpu_custom_call.1} parent=1 // pred_check_branch
      %844 = sbr.rel (0) target = $region45
    $region44: #{tpu_custom_call.1} parent=1 // pred_region
      %s846 = ssub.s32 64, 64
      %847 = vsyncadd [#allocation4], %s846
      %s849 = sshll.u32 [#allocation11], 4
      %s850 = int_to_ptr.vmem [resolvable:$true] %s849
      %852 = dma.vmem_to_hbm [thread:$0]  %s850, 64, %s5, [#allocation4]
    $region45: #{tpu_custom_call.1} parent=1 // pred_fallthru
      _
    // Predicated region
    $region46: #{tpu_custom_call.1} parent=1 // pred_check
      _
    $region47: #{tpu_custom_call.1} parent=1 // pred_check_branch
      %854 = sbr.rel (0) target = $region49
    $region48: #{tpu_custom_call.1} parent=1 // pred_region
      %855 = dma.done [#allocation4], 64
    $region49: #{tpu_custom_call.1} parent=1 // pred_fallthru
      _
    %856 = vsyncpa [#allocation3], 1
    %857 = vsyncpa [#allocation6], 1
    %858 = vsyncpa [#allocation9], 1
    %859 = vsyncpa [#allocation4], 1

</llo_original>
